<compile_context>
chip_gen: v7x
topology: tpu7x:2x2x1
jax: 0.10.0
libtpu: 0.0.40
codegen_flags: <defaults>
</compile_context>

<pallas_src>
import functools

import jax
import jax.numpy as jnp
from jax import lax
from jax.experimental import pallas as pl
from jax.experimental.pallas import tpu as pltpu


def _round_up(x, m):
    return ((x + m - 1) // m) * m


def _pick_tile_n(n, c, itemsize):
    # Keep the double-buffered pred tile (2 * TILE_N * C * itemsize) under
    # ~8 MiB so the tile also fits v7x's 64 MiB physical / 32 MiB scoped VMEM.
    budget_bytes = 8 * 1024 * 1024
    tile = budget_bytes // max(1, 2 * c * itemsize)
    tile = max(8, min(tile, 2048))
    tile = (tile // 8) * 8                 # sublane-aligned
    tile = min(tile, _round_up(n, 8))      # no point tiling past N
    return max(tile, 8)


def _nll_partial_kernel(pred_ref, tgt_ref, out_ref, *, n_total, tile_n,
                        needs_row_mask):
    # pred_ref: (tile_n, C) VMEM in input dtype; tgt_ref: (tile_n, 1) i32 VMEM
    # out_ref : (1, C) f32 VMEM -- per-tile, per-class partial sums of the
    #           selected log-probabilities (row reduce only; final sum + mean
    #           is done in the wrapper so the grid axis stays "parallel").
    pred = pred_ref[...].astype(jnp.float32)      # upcast in vregs (VPU filler)
    tgt = tgt_ref[...]                            # (tile_n, 1) int32
    tn, c = pred.shape

    # one-hot gather: select pred[i, target[i]] via lane-index comparison
    col_ids = lax.broadcasted_iota(jnp.int32, (tn, c), dimension=1)
    mask = col_ids == tgt                         # broadcast (tile_n,1)->(tile_n,C)

    if needs_row_mask:
        # zero out rows that are padding of the last (ragged) tile
        row_ids = lax.broadcasted_iota(jnp.int32, (tn, c), dimension=0)
        row_ids = row_ids + pl.program_id(0) * tile_n
        mask = mask & (row_ids < n_total)

    picked = jnp.where(mask, pred, jnp.zeros_like(pred))
    out_ref[...] = jnp.sum(picked, axis=0, keepdims=True)   # (1, C)


def get_loss(pred, target, trans_feat=None):
    """NLL loss (mean reduction) == F.nll_loss(pred, target) with default args.

    pred:       (N, C) log-probabilities (f32 or bf16; read in native dtype)
    target:     (N,)   integer class indices
    trans_feat: unused (kept for API parity with the PyTorch module)
    """
    del trans_feat  # unused in the reference forward pass
    n, c = pred.shape
    itemsize = jnp.dtype(pred.dtype).itemsize
    tgt2d = target.astype(jnp.int32).reshape(n, 1)

    tile_n = _pick_tile_n(n, c, itemsize)
    num_tiles = -(-n // tile_n)
    needs_row_mask = (tile_n * num_tiles) != n

    kernel = functools.partial(
        _nll_partial_kernel,
        n_total=n, tile_n=tile_n, needs_row_mask=needs_row_mask)

    partials = pl.pallas_call(
        kernel,
        out_shape=jax.ShapeDtypeStruct((num_tiles, c), jnp.float32),
        grid=(num_tiles,),
        in_specs=[
            pl.BlockSpec((tile_n, c), lambda i: (i, 0)),   # pred tile
            pl.BlockSpec((tile_n, 1), lambda i: (i, 0)),   # target tile
        ],
        out_specs=pl.BlockSpec((1, c), lambda i: (i, 0)),
        compiler_params=pltpu.CompilerParams(
            dimension_semantics=("parallel",)),
        cost_estimate=pl.CostEstimate(
            flops=2 * n * c,
            transcendentals=0,
            bytes_accessed=n * c * itemsize + n * 4 + num_tiles * c * 4,
        ),
    )(pred, tgt2d)

    # Final tiny reduce + single divide-by-N in the wrapper.
    return -jnp.sum(partials) / jnp.float32(n)


if __name__ == "__main__":
    key = jax.random.PRNGKey(0)
    k1, k2, k3 = jax.random.split(key, 3)

    # small classification-style shapes matching PointNet2 get_loss usage
    N, C = 8, 32
    logits = jax.random.normal(k1, (N, C), dtype=jnp.float32)
    pred = jax.nn.log_softmax(logits, axis=-1)            # log-probabilities
    target = jax.random.randint(k2, (N,), 0, C, dtype=jnp.int32)
    trans_feat = jax.random.normal(k3, (N, 3, 3), dtype=jnp.float32)  # unused

    loss = jax.block_until_ready(get_loss(pred, target, trans_feat))
    ref = -jnp.mean(pred[jnp.arange(N), target])
    assert jnp.allclose(loss, ref, atol=1e-6, rtol=1e-6), (loss, ref)

    # ragged case (N not a multiple of 8) exercising the padded-row mask
    N2, C2 = 20, 40
    k4, k5 = jax.random.split(k3)
    pred2 = jax.nn.log_softmax(
        jax.random.normal(k4, (N2, C2), dtype=jnp.float32), axis=-1)
    target2 = jax.random.randint(k5, (N2,), 0, C2, dtype=jnp.int32)
    loss2 = jax.block_until_ready(get_loss(pred2, target2))
    ref2 = -jnp.mean(pred2[jnp.arange(N2), target2])
    assert jnp.allclose(loss2, ref2, atol=1e-6, rtol=1e-6), (loss2, ref2)

    print("KERNEL_OK")
</pallas_src>

<mosaic_0001>
module attributes {stable_mosaic.version = 11 : i64} {
  func.func @_nll_partial_kernel(%arg0: i32, %arg1: memref<8x32xf32, #tpu.memory_space<vmem>>, %arg2: memref<8x1xi32, #tpu.memory_space<vmem>>, %arg3: memref<1x32xf32, #tpu.memory_space<vmem>>) attributes {dimension_semantics = [#tpu.dimension_semantics<parallel>], iteration_bounds = array<i64: 1>, scalar_prefetch = 0 : i64, scratch_operands = 0 : i64, tpu.core_type = #tpu.core_type<tc>, window_params = [{transform_indices = @transform_0, window_bounds = array<i64: 8, 32>}, {transform_indices = @transform_1, window_bounds = array<i64: 8, 1>}, {transform_indices = @transform_2, window_bounds = array<i64: 1, 32>}]} {
    %c0 = arith.constant 0 : index
    %c0_0 = arith.constant 0 : index
    %0 = vector.load %arg1[%c0, %c0_0] : memref<8x32xf32, #tpu.memory_space<vmem>>, vector<8x32xf32>
    %c0_1 = arith.constant 0 : index
    %c0_2 = arith.constant 0 : index
    %1 = vector.load %arg2[%c0_1, %c0_2] : memref<8x1xi32, #tpu.memory_space<vmem>>, vector<8x1xi32>
    %2 = tpu.iota {dimensions = array<i32: 1>} : vector<8x32xi32>
    %3 = vector.broadcast %1 : vector<8x1xi32> to vector<8x32xi32>
    %4 = arith.cmpi eq, %2, %3 : vector<8x32xi32>
    %cst = arith.constant 0.000000e+00 : f32
    %5 = vector.broadcast %cst : f32 to vector<8x32xf32>
    %6 = arith.select %4, %0, %5 : vector<8x32xi1>, vector<8x32xf32>
    %cst_3 = arith.constant dense<0.000000e+00> : vector<32xf32>
    %7 = vector.multi_reduction <add>, %6, %cst_3 [0] : vector<8x32xf32> to vector<32xf32>
    %8 = vector.shape_cast %7 : vector<32xf32> to vector<1x32xf32>
    %c0_4 = arith.constant 0 : index
    %c0_5 = arith.constant 0 : index
    %9 = vector.load %arg3[%c0_4, %c0_5] : memref<1x32xf32, #tpu.memory_space<vmem>>, vector<1x32xf32>
    tpu.vector_store %arg3[%c0_4, %c0_5], %8 {strides = array<i32>} : memref<1x32xf32, #tpu.memory_space<vmem>>, vector<1x32xf32>,
    return
  }
  func.func @transform_0(%arg0: i32) -> (i32, i32) {
    %c0_i32 = arith.constant 0 : i32
    %c0_i32_0 = arith.constant 0 : i32
    return %arg0, %c0_i32 : i32, i32
  }
  func.func @transform_1(%arg0: i32) -> (i32, i32) {
    %c0_i32 = arith.constant 0 : i32
    %c0_i32_0 = arith.constant 0 : i32
    return %arg0, %c0_i32 : i32, i32
  }
  func.func @transform_2(%arg0: i32) -> (i32, i32) {
    %c0_i32 = arith.constant 0 : i32
    %c0_i32_0 = arith.constant 0 : i32
    return %arg0, %c0_i32 : i32, i32
  }
}

</mosaic_0001>

<llo_original>
// kernel: tpu_custom_call.1
$region0: #{tpu_custom_call.1}
  #allocation0 [shape = 'u32[]', space=smem, size = 0x4, offset = 0x4, fixed_abs, tag = 'smem constant byte address 0x4 - core index']
  #allocation1 [shape = 'u32[144,128]{1,0:T(1,128)}', space=vmem, size = 0x12000, scoped, tag = 'internal scratch']
  %s0 = inlined_call_operand.vmem [shape: f32[8,32], index: 0, kind: input, shape index: {}]
  %s1 = inlined_call_operand.vmem [shape: s32[8,1], index: 1, kind: input, shape index: {}]
  %s2 = inlined_call_operand.hbm [shape: f32[1,32], index: 2, kind: output, shape index: {}]
  %s3 = sld [smem:[#allocation0]]
  $region18: #{tpu_custom_call.1} parent=0
    _
  %s5 = ssub.s32 1, %s3
  %s6 = scalar_select 0, %s5, %s3
  $region1: #{tpu_custom_call.1} parent=0
    #allocation2 [shape = 'u8[512]{0}', space=vmem, size = 0x400, scoped, tag = 'output window, operand 0, single buffered']
    #allocation3 [shape = 's32[1]{0}', space=sflag, size = 0x4, scoped, tag = 'scoped memory for tpu_custom_call.1']
    %7 = vsyncpa [#allocation3], 0
    // Predicated region
    $region2: #{tpu_custom_call.1} parent=1 // pred_check
      _
    $region3: #{tpu_custom_call.1} parent=1 // pred_check_branch
      %9 = sbr.rel (0) target = $region5
    $region4: #{tpu_custom_call.1} parent=1 // pred_region
      _
    $region5: #{tpu_custom_call.1} parent=1 // pred_fallthru
      _
    // Predicated region
    $region6: #{tpu_custom_call.1} parent=1 // pred_check
      _
    $region7: #{tpu_custom_call.1} parent=1 // pred_check_branch
      %11 = sbr.rel (0) target = $region9
    $region8: #{tpu_custom_call.1} parent=1 // pred_region
      _
    $region9: #{tpu_custom_call.1} parent=1 // pred_fallthru
      _
    %v12 = vld [vmem:[%s0] sm:$0xff]
    %v13 = vld [vmem:[%s1] sm:$0xff]
    %v14 = vlaneseq
    %v15 = vand.u32 %v14, 127
    %16 = vset.pattern.permute.xlu0 0
    %17 = vperm.xlu0 %16, %v13
    %v18 = vpop.permute.xlu0 %17
    %vm19 = vcmp.eq.s32.totalorder %v15, %v18
    %v20 = vsel %vm19, %v12, 0.0
    %vm21 = vcmask 261120
    %v22 = vsel %vm21, %v20, 0.0
    %v23 = vrot.slane %v22, 4
    %v24 = vadd.f32 %v22, %v23
    %v25 = vrot.slane %v24, 2
    %v26 = vadd.f32 %v24, %v25
    %v27 = vrot.slane %v26, 1
    %v28 = vadd.f32 %v26, %v27
    %vm29 = vcmask 253952
    %30 = vst.msk [vmem:[#allocation2] sm:$0x1] %vm29, %v28
    // Predicated region
    $region10: #{tpu_custom_call.1} parent=1 // pred_check
      _
    $region11: #{tpu_custom_call.1} parent=1 // pred_check_branch
      %32 = sbr.rel (0) target = $region13
    $region12: #{tpu_custom_call.1} parent=1 // pred_region
      %s34 = ssub.s32 16, 16
      %35 = vsyncadd [#allocation3], %s34
      %s37 = sshll.u32 [#allocation2], 4
      %s38 = int_to_ptr.vmem [resolvable:$true] %s37
      %40 = dma.vmem_to_hbm [thread:$0]  %s38, 16, %s2, [#allocation3]
    $region13: #{tpu_custom_call.1} parent=1 // pred_fallthru
      _
    // Predicated region
    $region14: #{tpu_custom_call.1} parent=1 // pred_check
      _
    $region15: #{tpu_custom_call.1} parent=1 // pred_check_branch
      %42 = sbr.rel (0) target = $region17
    $region16: #{tpu_custom_call.1} parent=1 // pred_region
      %43 = dma.done [#allocation3], 16
    $region17: #{tpu_custom_call.1} parent=1 // pred_fallthru
      _
    %44 = vsyncpa [#allocation3], 1

</llo_original>
